<compile_context>
chip_gen: v5e
topology: v5e:2x2
jax: 0.10.0
libtpu: 0.0.40
codegen_flags: <defaults>
</compile_context>

<pallas_src>
import functools
import math

import jax
import jax.numpy as jnp
from jax.experimental import pallas as pl
from jax.experimental.pallas import tpu as pltpu

_LANE = 128
_NEG_BIG = -1e30  # finite "−inf": keeps softmax/logsumexp exact while avoiding -inf*0 NaNs
_TILE_BUDGET = 8 * 1024 * 1024      # per feature tile (double-buffered by the pipeline)
_VMEM_LIMIT = 32 * 1024 * 1024      # explicit scoped-VMEM limit (also raises v5e's 16 MiB)


def _round_up(x, m):
    return ((x + m - 1) // m) * m


def _choose_tiles(B, S, H, itemsize, budget_bytes=_TILE_BUDGET):
    """Pick (tile_b, tile_s) so one feature tile stays <= ~8 MiB."""
    per_row = max(S * H * itemsize, 1)
    if per_row <= budget_bytes:
        tb = min(512, max(1, budget_bytes // per_row))
        tb = max(8, (tb // 8) * 8)              # multiple of 8 sublanes
        tb = min(tb, _round_up(B, 8))           # don't pad a tiny batch to a huge tile
        return int(tb), int(S)
    # Long-sequence fallback: tile the sequence axis too (reduction grid axis).
    tb = 8
    ts = max(8, ((budget_bytes // (tb * H * itemsize)) // 8) * 8)
    ts = min(ts, _round_up(S, 8))
    return int(tb), int(ts)


# ----------------------------------------------------------------------------
# Kernels
# ----------------------------------------------------------------------------
def _labeled_kernel(feat_ref, w_ref, b_ref, label_ref, ce_ref, correct_ref, acc_ref, *,
                    n_valid, inv_s):
    """label is not None branch. Emits per-sample CE and correct-flag for this batch tile
    (padded batch rows masked to 0); the wrapper reduces to mean loss / accuracy."""
    i = pl.program_id(0)
    j = pl.program_id(1)
    tb = feat_ref.shape[0]
    n_pad = w_ref.shape[1]

    @pl.when(j == 0)
    def _():
        acc_ref[...] = jnp.zeros_like(acc_ref)

    # Sequence sum: native-dtype feature tile, f32 accumulation across seq grid steps.
    acc_ref[...] += jnp.sum(feat_ref[...], axis=1, dtype=jnp.float32)      # (TB, H)

    @pl.when(j == pl.num_programs(1) - 1)
    def _():
        mean_feat = acc_ref[...] * inv_s                                    # true-S mean
        logits = jnp.dot(mean_feat, w_ref[...],
                         preferred_element_type=jnp.float32) + b_ref[...]   # (TB, Npad)

        labels = label_ref[...]                                             # (TB, 1) i32
        col = jax.lax.broadcasted_iota(jnp.int32, (tb, n_pad), 1)           # (TB, Npad)

        # Cross-entropy (padded columns hold -1e30 so exp() underflows to 0).
        row_max = jnp.max(logits, axis=1, keepdims=True)                    # (TB, 1)
        lse = row_max + jnp.log(jnp.sum(jnp.exp(logits - row_max),
                                        axis=1, keepdims=True))
        one_hot = (col == labels).astype(jnp.float32)
        picked = jnp.sum(logits * one_hot, axis=1, keepdims=True)           # (TB, 1)
        ce = lse - picked                                                   # (TB, 1)

        # Accuracy: first-occurrence argmax (padded cols never win: they are -1e30).
        is_max = logits == row_max
        pred = jnp.min(jnp.where(is_max, col, n_pad), axis=1, keepdims=True)
        correct = (pred == labels).astype(jnp.float32)

        # Zero out padded batch rows so the wrapper can sum blindly.
        row = jax.lax.broadcasted_iota(jnp.int32, (tb, 1), 0) + i * tb
        valid = (row < n_valid).astype(jnp.float32)
        ce_ref[...] = ce * valid
        correct_ref[...] = correct * valid


def _unlabeled_kernel(feat_ref, w_ref, b_ref, loss_ref, acc_ref, *, inv_s):
    """label is None branch: per-sample negative entropy (log_softmax * softmax).sum(1)."""
    j = pl.program_id(1)

    @pl.when(j == 0)
    def _():
        acc_ref[...] = jnp.zeros_like(acc_ref)

    acc_ref[...] += jnp.sum(feat_ref[...], axis=1, dtype=jnp.float32)       # (TB, H)

    @pl.when(j == pl.num_programs(1) - 1)
    def _():
        mean_feat = acc_ref[...] * inv_s
        logits = jnp.dot(mean_feat, w_ref[...],
                         preferred_element_type=jnp.float32) + b_ref[...]   # (TB, Npad)

        row_max = jnp.max(logits, axis=1, keepdims=True)
        shifted = logits - row_max
        log_z = jnp.log(jnp.sum(jnp.exp(shifted), axis=1, keepdims=True))
        logp = shifted - log_z                                              # log_softmax
        p = jnp.exp(logp)                                                   # softmax
        # Padded columns: p == 0 exactly and logp is finite big-negative -> contribute 0.
        loss_ref[...] = jnp.sum(logp * p, axis=1, keepdims=True)            # (TB, 1)


# ----------------------------------------------------------------------------
# Module wrapper
# ----------------------------------------------------------------------------
class AdvSpeakerCriterionPallas:
    def __init__(self, dimEncoder, nSpeakers, onEncoder, key):
        self.dimEncoder = dimEncoder
        self.nSpeakers = nSpeakers
        self.onEncoder = onEncoder
        k_w, k_b = jax.random.split(key)
        bound = 1.0 / math.sqrt(dimEncoder)
        # nn.Linear(dimEncoder, nSpeakers): weight (nSpeakers, dimEncoder), bias (nSpeakers,)
        # stored pre-transposed as (dimEncoder, nSpeakers) for direct matmul.
        self.W = jax.random.uniform(k_w, (dimEncoder, nSpeakers),
                                    minval=-bound, maxval=bound, dtype=jnp.float32)
        self.b = jax.random.uniform(k_b, (1, nSpeakers),
                                    minval=-bound, maxval=bound, dtype=jnp.float32)
        # Lane-padded parameter copies for a 128-lane-dense logits tile.
        self.n_pad = _round_up(nSpeakers, _LANE)
        self.W_pad = jnp.zeros((dimEncoder, self.n_pad),
                               jnp.float32).at[:, :nSpeakers].set(self.W)
        self.b_pad = jnp.full((1, self.n_pad), _NEG_BIG,
                              jnp.float32).at[:, :nSpeakers].set(self.b)
        print(f"{nSpeakers} found")

    def __call__(self, cFeature, otherEncoded, label=None, tile_b=None, tile_s=None):
        features = otherEncoded if self.onEncoder else cFeature
        B, S, H = features.shape
        itemsize = jnp.dtype(features.dtype).itemsize

        tb, ts = _choose_tiles(B, S, H, itemsize)
        if tile_b is not None:
            tb = int(tile_b)
        if tile_s is not None:
            ts = int(tile_s)

        b_padded = _round_up(B, tb)
        s_padded = _round_up(S, ts)
        nb = b_padded // tb
        ns = s_padded // ts
        if (b_padded, s_padded) != (B, S):
            features = jnp.pad(features,
                               ((0, b_padded - B), (0, s_padded - S), (0, 0)))

        n_pad = self.n_pad
        feat_spec = pl.BlockSpec((tb, ts, H), lambda i, j: (i, j, 0))
        w_spec = pl.BlockSpec((H, n_pad), lambda i, j: (0, 0))
        bias_spec = pl.BlockSpec((1, n_pad), lambda i, j: (0, 0))
        row_spec = pl.BlockSpec((tb, 1), lambda i, j: (i, 0))

        cost = pl.CostEstimate(
            flops=int(2 * b_padded * H * n_pad + b_padded * s_padded * H),
            transcendentals=int(b_padded * n_pad),
            bytes_accessed=int(b_padded * s_padded * H * itemsize
                               + H * n_pad * 4 + n_pad * 4 + 2 * b_padded * 4),
        )
        cparams = pltpu.CompilerParams(
            dimension_semantics=("parallel", "arbitrary"),
            vmem_limit_bytes=_VMEM_LIMIT,
        )
        scratch = [pltpu.VMEM((tb, H), jnp.float32)]

        if label is None:
            kern = functools.partial(_unlabeled_kernel, inv_s=1.0 / S)
            neg_ent = pl.pallas_call(
                kern,
                out_shape=jax.ShapeDtypeStruct((b_padded, 1), jnp.float32),
                grid=(nb, ns),
                in_specs=[feat_spec, w_spec, bias_spec],
                out_specs=row_spec,
                scratch_shapes=scratch,
                compiler_params=cparams,
                cost_estimate=cost,
            )(features, self.W_pad, self.b_pad)
            loss = neg_ent[:B, 0]                                 # (B,)
            acc = jnp.zeros((1, 1), jnp.float32)
            return loss, acc
        else:
            label2d = label.reshape(-1, 1).astype(jnp.int32)
            if b_padded != B:
                label2d = jnp.pad(label2d, ((0, b_padded - B), (0, 0)))
            kern = functools.partial(_labeled_kernel, n_valid=B, inv_s=1.0 / S)
            ce_rows, correct_rows = pl.pallas_call(
                kern,
                out_shape=(jax.ShapeDtypeStruct((b_padded, 1), jnp.float32),
                           jax.ShapeDtypeStruct((b_padded, 1), jnp.float32)),
                grid=(nb, ns),
                in_specs=[feat_spec, w_spec, bias_spec, row_spec],
                out_specs=(row_spec, row_spec),
                scratch_shapes=scratch,
                compiler_params=cparams,
                cost_estimate=cost,
            )(features, self.W_pad, self.b_pad, label2d)
            loss = (jnp.sum(ce_rows) / B).reshape(1, 1)           # (1, 1)
            acc = (jnp.sum(correct_rows) / B).reshape(1, 1)       # (1, 1)
            return loss, acc


# ----------------------------------------------------------------------------
# Reference (plain JAX) for sanity checking
# ----------------------------------------------------------------------------
def _reference(features, W, b, label):
    mean_feat = jnp.mean(features.astype(jnp.float32), axis=1)
    logits = mean_feat @ W + b
    if label is None:
        logp = jax.nn.log_softmax(logits, axis=1)
        p = jax.nn.softmax(logits, axis=1)
        loss = jnp.sum(logp * p, axis=1)
        acc = jnp.zeros((1, 1), jnp.float32)
        return loss, acc
    lse = jax.scipy.special.logsumexp(logits, axis=1)
    picked = jnp.take_along_axis(logits, label.reshape(-1, 1), axis=1)[:, 0]
    loss = jnp.mean(lse - picked).reshape(1, 1)
    acc = jnp.mean((jnp.argmax(logits, axis=1) == label).astype(jnp.float32)).reshape(1, 1)
    return loss, acc


if __name__ == "__main__":
    B, S, H, N_SPK = 2, 8, 32, 10

    key = jax.random.PRNGKey(0)
    k1, k2, k3, k4, k5, k6 = jax.random.split(key, 6)
    cFeature = jax.random.normal(k1, (B, S, H), dtype=jnp.float32)
    otherEncoded = jax.random.normal(k2, (B, S, H), dtype=jnp.float32)
    label = jax.random.randint(k3, (B,), 0, N_SPK, dtype=jnp.int32)

    crit = AdvSpeakerCriterionPallas(dimEncoder=H, nSpeakers=N_SPK, onEncoder=False, key=k4)

    # labeled branch
    loss_l, acc_l = crit(cFeature, otherEncoded, label)
    jax.block_until_ready((loss_l, acc_l))
    ref_loss_l, ref_acc_l = _reference(cFeature, crit.W, crit.b, label)
    assert loss_l.shape == (1, 1) and acc_l.shape == (1, 1)
    assert jnp.allclose(loss_l, ref_loss_l, rtol=1e-5, atol=1e-5)
    assert jnp.allclose(acc_l, ref_acc_l, rtol=1e-5, atol=1e-5)

    # unlabeled branch (label is None)
    loss_u, acc_u = crit(cFeature, otherEncoded, None)
    jax.block_until_ready((loss_u, acc_u))
    ref_loss_u, ref_acc_u = _reference(cFeature, crit.W, crit.b, None)
    assert loss_u.shape == (B,)
    assert jnp.allclose(loss_u, ref_loss_u, rtol=1e-5, atol=1e-5)
    assert jnp.allclose(acc_u, ref_acc_u, rtol=1e-5, atol=1e-5)

    # multi-block batch grid + batch padding path (forces several batch tiles)
    B2 = 20
    feat2 = jax.random.normal(k5, (B2, S, H), dtype=jnp.float32)
    label2 = jax.random.randint(k3, (B2,), 0, N_SPK, dtype=jnp.int32)
    loss_m, acc_m = crit(feat2, feat2, label2, tile_b=8)
    jax.block_until_ready((loss_m, acc_m))
    ref_loss_m, ref_acc_m = _reference(feat2, crit.W, crit.b, label2)
    assert jnp.allclose(loss_m, ref_loss_m, rtol=1e-5, atol=1e-5)
    assert jnp.allclose(acc_m, ref_acc_m, rtol=1e-5, atol=1e-5)
    loss_m2, _ = crit(feat2, feat2, None, tile_b=8)
    jax.block_until_ready(loss_m2)
    ref_loss_m2, _ = _reference(feat2, crit.W, crit.b, None)
    assert jnp.allclose(loss_m2, ref_loss_m2, rtol=1e-5, atol=1e-5)

    # sequence-tiled path (batch padding + seq padding + multi-step seq accumulation)
    B3, S3 = 12, 20
    feat3 = jax.random.normal(k6, (B3, S3, H), dtype=jnp.float32)
    label3 = jax.random.randint(k3, (B3,), 0, N_SPK, dtype=jnp.int32)
    loss_s, acc_s = crit(feat3, feat3, label3, tile_b=8, tile_s=8)
    jax.block_until_ready((loss_s, acc_s))
    ref_loss_s, ref_acc_s = _reference(feat3, crit.W, crit.b, label3)
    assert jnp.allclose(loss_s, ref_loss_s, rtol=1e-5, atol=1e-5)
    assert jnp.allclose(acc_s, ref_acc_s, rtol=1e-5, atol=1e-5)
    loss_s2, _ = crit(feat3, feat3, None, tile_b=8, tile_s=8)
    jax.block_until_ready(loss_s2)
    ref_loss_s2, _ = _reference(feat3, crit.W, crit.b, None)
    assert jnp.allclose(loss_s2, ref_loss_s2, rtol=1e-5, atol=1e-5)

    print("KERNEL_OK")
</pallas_src>

<mosaic_0001>
module attributes {stable_mosaic.version = 11 : i64} {
  func.func @_labeled_kernel(%arg0: i32, %arg1: i32, %arg2: memref<8x8x32xf32, #tpu.memory_space<vmem>>, %arg3: memref<32x128xf32, #tpu.memory_space<vmem>>, %arg4: memref<1x128xf32, #tpu.memory_space<vmem>>, %arg5: memref<8x1xi32, #tpu.memory_space<vmem>>, %arg6: memref<8x1xf32, #tpu.memory_space<vmem>>, %arg7: memref<8x1xf32, #tpu.memory_space<vmem>>, %arg8: memref<8x32xf32, #tpu.memory_space<vmem>>) attributes {dimension_semantics = [#tpu.dimension_semantics<parallel>, #tpu.dimension_semantics<arbitrary>], iteration_bounds = array<i64: 1, 1>, scalar_prefetch = 0 : i64, scratch_operands = 1 : i64, tpu.core_type = #tpu.core_type<tc>, window_params = [{transform_indices = @transform_0, window_bounds = array<i64: 8, 8, 32>}, {pipeline_mode = #tpu.pipeline_mode<synchronous>, transform_indices = @transform_1, window_bounds = array<i64: 32, 128>}, {pipeline_mode = #tpu.pipeline_mode<synchronous>, transform_indices = @transform_2, window_bounds = array<i64: 1, 128>}, {transform_indices = @transform_3, window_bounds = array<i64: 8, 1>}, {transform_indices = @transform_4, window_bounds = array<i64: 8, 1>}, {transform_indices = @transform_5, window_bounds = array<i64: 8, 1>}]} {
    %c0_i32 = arith.constant 0 : i32
    %0 = arith.cmpi eq, %arg1, %c0_i32 : i32
    %1 = arith.extui %0 : i1 to i32
    %c0_i32_0 = arith.constant 0 : i32
    %2 = arith.cmpi ne, %1, %c0_i32_0 : i32
    scf.if %2 {
      %cst_9 = arith.constant 0.000000e+00 : f32
      %11 = vector.broadcast %cst_9 : f32 to vector<8x32xf32>
      %c0_10 = arith.constant 0 : index
      %c0_11 = arith.constant 0 : index
      %12 = vector.load %arg8[%c0_10, %c0_11] : memref<8x32xf32, #tpu.memory_space<vmem>>, vector<8x32xf32>
      tpu.vector_store %arg8[%c0_10, %c0_11], %11 {strides = array<i32>} : memref<8x32xf32, #tpu.memory_space<vmem>>, vector<8x32xf32>,
    } else {
    }
    %c0 = arith.constant 0 : index
    %c0_1 = arith.constant 0 : index
    %3 = vector.load %arg8[%c0, %c0_1] : memref<8x32xf32, #tpu.memory_space<vmem>>, vector<8x32xf32>
    %c0_2 = arith.constant 0 : index
    %c0_3 = arith.constant 0 : index
    %c0_4 = arith.constant 0 : index
    %4 = vector.load %arg2[%c0_2, %c0_3, %c0_4] : memref<8x8x32xf32, #tpu.memory_space<vmem>>, vector<8x8x32xf32>
    %cst = arith.constant dense<0.000000e+00> : vector<8x32xf32>
    %5 = vector.multi_reduction <add>, %4, %cst [1] : vector<8x8x32xf32> to vector<8x32xf32>
    %6 = arith.addf %3, %5 : vector<8x32xf32>
    %c0_5 = arith.constant 0 : index
    %c0_6 = arith.constant 0 : index
    %7 = vector.load %arg8[%c0_5, %c0_6] : memref<8x32xf32, #tpu.memory_space<vmem>>, vector<8x32xf32>
    tpu.vector_store %arg8[%c0_5, %c0_6], %6 {strides = array<i32>} : memref<8x32xf32, #tpu.memory_space<vmem>>, vector<8x32xf32>,
    %c0_i32_7 = arith.constant 0 : i32
    %8 = arith.cmpi eq, %arg1, %c0_i32_7 : i32
    %9 = arith.extui %8 : i1 to i32
    %c0_i32_8 = arith.constant 0 : i32
    %10 = arith.cmpi ne, %9, %c0_i32_8 : i32
    scf.if %10 {
      %c0_9 = arith.constant 0 : index
      %c0_10 = arith.constant 0 : index
      %11 = vector.load %arg8[%c0_9, %c0_10] : memref<8x32xf32, #tpu.memory_space<vmem>>, vector<8x32xf32>
      %cst_11 = arith.constant 1.250000e-01 : f32
      %12 = vector.broadcast %cst_11 : f32 to vector<8x32xf32>
      %13 = arith.mulf %11, %12 : vector<8x32xf32>
      %c0_12 = arith.constant 0 : index
      %c0_13 = arith.constant 0 : index
      %14 = vector.load %arg3[%c0_12, %c0_13] : memref<32x128xf32, #tpu.memory_space<vmem>>, vector<32x128xf32>
      %cst_14 = arith.constant dense<0.000000e+00> : vector<8x128xf32>
      %15 = tpu.matmul %13, %14, %cst_14 {dimension_numbers = #tpu.dot_dimension_numbers<[1], [0], [0], [1], [0, 0, 1, 1], [], []>} : vector<8x32xf32>, vector<32x128xf32>, vector<8x128xf32> -> vector<8x128xf32>
      %c0_15 = arith.constant 0 : index
      %c0_16 = arith.constant 0 : index
      %16 = vector.load %arg4[%c0_15, %c0_16] : memref<1x128xf32, #tpu.memory_space<vmem>>, vector<1x128xf32>
      %17 = vector.broadcast %16 : vector<1x128xf32> to vector<8x128xf32>
      %18 = arith.addf %15, %17 : vector<8x128xf32>
      %c0_17 = arith.constant 0 : index
      %c0_18 = arith.constant 0 : index
      %19 = vector.load %arg5[%c0_17, %c0_18] : memref<8x1xi32, #tpu.memory_space<vmem>>, vector<8x1xi32>
      %20 = tpu.iota {dimensions = array<i32: 1>} : vector<8x128xi32>
      %cst_19 = arith.constant dense<0xFF800000> : vector<8xf32>
      %21 = vector.multi_reduction <maximumf>, %18, %cst_19 [1] : vector<8x128xf32> to vector<8xf32>
      %22 = vector.shape_cast %21 : vector<8xf32> to vector<8x1xf32>
      %23 = vector.broadcast %22 : vector<8x1xf32> to vector<8x128xf32>
      %24 = arith.subf %18, %23 : vector<8x128xf32>
      %25 = math.exp %24 : vector<8x128xf32>
      %cst_20 = arith.constant dense<0.000000e+00> : vector<8xf32>
      %26 = vector.multi_reduction <add>, %25, %cst_20 [1] : vector<8x128xf32> to vector<8xf32>
      %27 = vector.shape_cast %26 : vector<8xf32> to vector<8x1xf32>
      %28 = math.log %27 : vector<8x1xf32>
      %29 = arith.addf %22, %28 : vector<8x1xf32>
      %30 = vector.broadcast %19 : vector<8x1xi32> to vector<8x128xi32>
      %31 = arith.cmpi eq, %20, %30 : vector<8x128xi32>
      %32 = arith.extui %31 : vector<8x128xi1> to vector<8x128xi32>
      %33 = arith.sitofp %32 : vector<8x128xi32> to vector<8x128xf32>
      %34 = arith.mulf %18, %33 : vector<8x128xf32>
      %cst_21 = arith.constant dense<0.000000e+00> : vector<8xf32>
      %35 = vector.multi_reduction <add>, %34, %cst_21 [1] : vector<8x128xf32> to vector<8xf32>
      %36 = vector.shape_cast %35 : vector<8xf32> to vector<8x1xf32>
      %37 = arith.subf %29, %36 : vector<8x1xf32>
      %38 = vector.broadcast %22 : vector<8x1xf32> to vector<8x128xf32>
      %39 = arith.cmpf oeq, %18, %38 : vector<8x128xf32>
      %c128_i32 = arith.constant 128 : i32
      %40 = vector.broadcast %c128_i32 : i32 to vector<8x128xi32>
      %41 = arith.select %39, %20, %40 : vector<8x128xi1>, vector<8x128xi32>
      %cst_22 = arith.constant dense<2147483647> : vector<8xi32>
      %42 = vector.multi_reduction <minsi>, %41, %cst_22 [1] : vector<8x128xi32> to vector<8xi32>
      %43 = vector.shape_cast %42 : vector<8xi32> to vector<8x1xi32>
      %44 = arith.cmpi eq, %43, %19 : vector<8x1xi32>
      %45 = arith.extui %44 : vector<8x1xi1> to vector<8x1xi32>
      %46 = arith.sitofp %45 : vector<8x1xi32> to vector<8x1xf32>
      %47 = tpu.iota {dimensions = array<i32: 0>} : vector<8x1xi32>
      %c8_i32 = arith.constant 8 : i32
      %48 = arith.muli %arg0, %c8_i32 : i32
      %49 = vector.broadcast %48 : i32 to vector<8x1xi32>
      %50 = arith.addi %47, %49 : vector<8x1xi32>
      %c2_i32 = arith.constant 2 : i32
      %51 = vector.broadcast %c2_i32 : i32 to vector<8x1xi32>
      %52 = arith.cmpi slt, %50, %51 : vector<8x1xi32>
      %53 = arith.extui %52 : vector<8x1xi1> to vector<8x1xi32>
      %54 = arith.sitofp %53 : vector<8x1xi32> to vector<8x1xf32>
      %55 = arith.mulf %37, %54 : vector<8x1xf32>
      %c0_23 = arith.constant 0 : index
      %c0_24 = arith.constant 0 : index
      %56 = vector.load %arg6[%c0_23, %c0_24] : memref<8x1xf32, #tpu.memory_space<vmem>>, vector<8x1xf32>
      tpu.vector_store %arg6[%c0_23, %c0_24], %55 {strides = array<i32>} : memref<8x1xf32, #tpu.memory_space<vmem>>, vector<8x1xf32>,
      %57 = arith.mulf %46, %54 : vector<8x1xf32>
      %c0_25 = arith.constant 0 : index
      %c0_26 = arith.constant 0 : index
      %58 = vector.load %arg7[%c0_25, %c0_26] : memref<8x1xf32, #tpu.memory_space<vmem>>, vector<8x1xf32>
      tpu.vector_store %arg7[%c0_25, %c0_26], %57 {strides = array<i32>} : memref<8x1xf32, #tpu.memory_space<vmem>>, vector<8x1xf32>,
    } else {
    }
    return
  }
  func.func @transform_0(%arg0: i32, %arg1: i32) -> (i32, i32, i32) {
    %c0_i32 = arith.constant 0 : i32
    %c0_i32_0 = arith.constant 0 : i32
    return %arg0, %arg1, %c0_i32 : i32, i32, i32
  }
  func.func @transform_1(%arg0: i32, %arg1: i32) -> (i32, i32) {
    %c0_i32 = arith.constant 0 : i32
    %c0_i32_0 = arith.constant 0 : i32
    %c0_i32_1 = arith.constant 0 : i32
    return %c0_i32, %c0_i32_0 : i32, i32
  }
  func.func @transform_2(%arg0: i32, %arg1: i32) -> (i32, i32) {
    %c0_i32 = arith.constant 0 : i32
    %c0_i32_0 = arith.constant 0 : i32
    %c0_i32_1 = arith.constant 0 : i32
    return %c0_i32, %c0_i32_0 : i32, i32
  }
  func.func @transform_3(%arg0: i32, %arg1: i32) -> (i32, i32) {
    %c0_i32 = arith.constant 0 : i32
    %c0_i32_0 = arith.constant 0 : i32
    return %arg0, %c0_i32 : i32, i32
  }
  func.func @transform_4(%arg0: i32, %arg1: i32) -> (i32, i32) {
    %c0_i32 = arith.constant 0 : i32
    %c0_i32_0 = arith.constant 0 : i32
    return %arg0, %c0_i32 : i32, i32
  }
  func.func @transform_5(%arg0: i32, %arg1: i32) -> (i32, i32) {
    %c0_i32 = arith.constant 0 : i32
    %c0_i32_0 = arith.constant 0 : i32
    return %arg0, %c0_i32 : i32, i32
  }
}

</mosaic_0001>

<llo_original>
// kernel: tpu_custom_call.1
$region0: #{tpu_custom_call.1}
  #allocation0 [shape = 'u32[]', space=smem, size = 0x4, offset = 0x4, fixed_abs, tag = 'smem constant byte address 0x4 - core index']
  #allocation1 [shape = 'u32[72,128]{1,0:T(1,128)}', space=vmem, size = 0x9000, scoped, tag = 'internal scratch']
  #allocation2 [shape = 'f32[8,32]{1,0:T(8,128)}', space=vmem, size = 0x1000, scoped, tag = 'scratch operand']
  %s0 = inlined_call_operand.hbm [shape: f32[8,8,32], index: 0, kind: input, shape index: {}]
  %s1 = inlined_call_operand.hbm [shape: f32[32,128], index: 1, kind: input, shape index: {}]
  %s2 = inlined_call_operand.vmem [shape: f32[1,128], index: 2, kind: input, shape index: {}]
  %s3 = inlined_call_operand.vmem [shape: s32[8,1], index: 3, kind: input, shape index: {}]
  %s4 = inlined_call_operand.vmem [shape: f32[8,1], index: 4, kind: output, shape index: {0}]
  %s5 = inlined_call_operand.vmem [shape: f32[8,1], index: 5, kind: output, shape index: {1}]
  %6 = xla_tuple %s4, %s5
  %s7 = sld [smem:[#allocation0]]
  $region50: #{tpu_custom_call.1} parent=0
    _
  %s9 = ssub.s32 1, %s7
  %s10 = scalar_select 0, %s9, %s7
  $region1: #{tpu_custom_call.1} parent=0
    #allocation3 [shape = 'u8[32768]{0}', space=vmem, size = 0x8000, scoped, tag = 'input window, operand 0, single buffered']
    #allocation4 [shape = 's32[1]{0}', space=sflag, size = 0x4, scoped, tag = 'scoped memory for tpu_custom_call.1']
    #allocation5 [shape = 'u8[16384]{0}', space=vmem, size = 0x4000, scoped, tag = 'input window, operand 1, single buffered']
    #allocation6 [shape = 's32[1]{0}', space=sflag, size = 0x4, scoped, tag = 'scoped memory for tpu_custom_call.1']
    %11 = vsyncpa [#allocation4], 0
    %12 = vsyncpa [#allocation6], 0
    // Predicated region
    $region2: #{tpu_custom_call.1} parent=1 // pred_check
      _
    $region3: #{tpu_custom_call.1} parent=1 // pred_check_branch
      %14 = sbr.rel (0) target = $region5
    $region4: #{tpu_custom_call.1} parent=1 // pred_region
      %16 = vsyncadd [#allocation4], 0
      %s17 = sshll.u32 %s0, 4
      %s18 = int_to_ptr.hbm [resolvable:$true] %s17
      %s19 = sshll.u32 [#allocation3], 4
      %s20 = int_to_ptr.vmem [resolvable:$true] %s19
      %25 = dma.hbm_to_vmem [thread:$0]  %s18, 1024, %s20, [#allocation4], 128, 128, 8
    $region5: #{tpu_custom_call.1} parent=1 // pred_fallthru
      _
    // Predicated region
    $region6: #{tpu_custom_call.1} parent=1 // pred_check
      _
    $region7: #{tpu_custom_call.1} parent=1 // pred_check_branch
      %27 = sbr.rel (0) target = $region9
    $region8: #{tpu_custom_call.1} parent=1 // pred_region
      %29 = vsyncadd [#allocation6], 0
      %s30 = sshll.u32 %s1, 4
      %s31 = int_to_ptr.hbm [resolvable:$true] %s30
      %s32 = sshll.u32 [#allocation5], 4
      %s33 = int_to_ptr.vmem [resolvable:$true] %s32
      %38 = dma.hbm_to_vmem [thread:$0]  %s31, 512, %s33, [#allocation6], 128, 128, 8
    $region9: #{tpu_custom_call.1} parent=1 // pred_fallthru
      _
    // Predicated region
    $region10: #{tpu_custom_call.1} parent=1 // pred_check
      _
    $region11: #{tpu_custom_call.1} parent=1 // pred_check_branch
      %40 = sbr.rel (0) target = $region13
    $region12: #{tpu_custom_call.1} parent=1 // pred_region
      _
    $region13: #{tpu_custom_call.1} parent=1 // pred_fallthru
      _
    // Predicated region
    $region14: #{tpu_custom_call.1} parent=1 // pred_check
      _
    $region15: #{tpu_custom_call.1} parent=1 // pred_check_branch
      %42 = sbr.rel (0) target = $region17
    $region16: #{tpu_custom_call.1} parent=1 // pred_region
      _
    $region17: #{tpu_custom_call.1} parent=1 // pred_fallthru
      _
    // Predicated region
    $region18: #{tpu_custom_call.1} parent=1 // pred_check
      _
    $region19: #{tpu_custom_call.1} parent=1 // pred_check_branch
      %44 = sbr.rel (0) target = $region21
    $region20: #{tpu_custom_call.1} parent=1 // pred_region
      %46 = dma.done [#allocation4], 1024
    $region21: #{tpu_custom_call.1} parent=1 // pred_fallthru
      _
    // Predicated region
    $region22: #{tpu_custom_call.1} parent=1 // pred_check
      _
    $region23: #{tpu_custom_call.1} parent=1 // pred_check_branch
      %48 = sbr.rel (0) target = $region25
    $region24: #{tpu_custom_call.1} parent=1 // pred_region
      %50 = dma.done [#allocation6], 512
    $region25: #{tpu_custom_call.1} parent=1 // pred_fallthru
      _
    %p51 = scmp.eq.s32.totalorder 0, 0
    // Predicated region
    $region26: #{tpu_custom_call.1} parent=1 // pred_check
      %p52 = pneg %p51
    $region27: #{tpu_custom_call.1} parent=1 // pred_check_branch
      %54 = sbr.rel (%p52) target = $region29
    $region28: #{tpu_custom_call.1} parent=1 // pred_region
      %vm55 = vcmask 261120
      %56 = vst.msk [vmem:[#allocation2] sm:$0xff] %vm55, 0.0
    $region29: #{tpu_custom_call.1} parent=1 // pred_fallthru
      _
    %v57 = vld [vmem:[#allocation2] sm:$0xff]
    %v58 = vld [vmem:[#allocation3] sm:$0xff]
    %v59 = vld [vmem:[#allocation3 + $0x8] sm:$0xff]
    %v60 = vld [vmem:[#allocation3 + $0x10] sm:$0xff]
    %v61 = vld [vmem:[#allocation3 + $0x18] sm:$0xff]
    %v62 = vld [vmem:[#allocation3 + $0x20] sm:$0xff]
    %v63 = vld [vmem:[#allocation3 + $0x28] sm:$0xff]
    %v64 = vld [vmem:[#allocation3 + $0x30] sm:$0xff]
    %v65 = vld [vmem:[#allocation3 + $0x38] sm:$0xff]
    %vm66 = vcmask 261120
    %v67 = vsel %vm66, %v58, 0.0
    %v68 = vrot.slane %v67, 4
    %v69 = vadd.f32 %v67, %v68
    %v70 = vrot.slane %v69, 2
    %v71 = vadd.f32 %v69, %v70
    %v72 = vrot.slane %v71, 1
    %v73 = vadd.f32 %v71, %v72
    %v74 = vsel %vm66, %v59, 0.0
    %v75 = vrot.slane %v74, 4
    %v76 = vadd.f32 %v74, %v75
    %v77 = vrot.slane %v76, 2
    %v78 = vadd.f32 %v76, %v77
    %v79 = vrot.slane %v78, 1
    %v80 = vadd.f32 %v78, %v79
    %v81 = vsel %vm66, %v60, 0.0
    %v82 = vrot.slane %v81, 4
    %v83 = vadd.f32 %v81, %v82
    %v84 = vrot.slane %v83, 2
    %v85 = vadd.f32 %v83, %v84
    %v86 = vrot.slane %v85, 1
    %v87 = vadd.f32 %v85, %v86
    %v88 = vsel %vm66, %v61, 0.0
    %v89 = vrot.slane %v88, 4
    %v90 = vadd.f32 %v88, %v89
    %v91 = vrot.slane %v90, 2
    %v92 = vadd.f32 %v90, %v91
    %v93 = vrot.slane %v92, 1
    %v94 = vadd.f32 %v92, %v93
    %v95 = vsel %vm66, %v62, 0.0
    %v96 = vrot.slane %v95, 4
    %v97 = vadd.f32 %v95, %v96
    %v98 = vrot.slane %v97, 2
    %v99 = vadd.f32 %v97, %v98
    %v100 = vrot.slane %v99, 1
    %v101 = vadd.f32 %v99, %v100
    %v102 = vsel %vm66, %v63, 0.0
    %v103 = vrot.slane %v102, 4
    %v104 = vadd.f32 %v102, %v103
    %v105 = vrot.slane %v104, 2
    %v106 = vadd.f32 %v104, %v105
    %v107 = vrot.slane %v106, 1
    %v108 = vadd.f32 %v106, %v107
    %v109 = vsel %vm66, %v64, 0.0
    %v110 = vrot.slane %v109, 4
    %v111 = vadd.f32 %v109, %v110
    %v112 = vrot.slane %v111, 2
    %v113 = vadd.f32 %v111, %v112
    %v114 = vrot.slane %v113, 1
    %v115 = vadd.f32 %v113, %v114
    %v116 = vsel %vm66, %v65, 0.0
    %v117 = vrot.slane %v116, 4
    %v118 = vadd.f32 %v116, %v117
    %v119 = vrot.slane %v118, 2
    %v120 = vadd.f32 %v118, %v119
    %v121 = vrot.slane %v120, 1
    %v122 = vadd.f32 %v120, %v121
    %vm131 = vcmask 1041409
    %v132 = vsel %vm131, %v80, %v73
    %vm133 = vcmask 1042434
    %v134 = vsel %vm133, %v87, %v132
    %vm135 = vcmask 1043459
    %v136 = vsel %vm135, %v94, %v134
    %vm137 = vcmask 1044484
    %v138 = vsel %vm137, %v101, %v136
    %vm139 = vcmask 1045509
    %v140 = vsel %vm139, %v108, %v138
    %vm141 = vcmask 1046534
    %v142 = vsel %vm141, %v115, %v140
    %vm143 = vcmask 1047559
    %v144 = vsel %vm143, %v122, %v142
    %v146 = vadd.f32 %v57, %v144
    %147 = vst.msk [vmem:[#allocation2] sm:$0xff] %vm66, %v146
    // Predicated region
    $region30: #{tpu_custom_call.1} parent=1 // pred_check
      %p148 = pneg %p51
    $region31: #{tpu_custom_call.1} parent=1 // pred_check_branch
      %150 = sbr.rel (%p148) target = $region33
    $region32: #{tpu_custom_call.1} parent=1 // pred_region
      %v151 = vld [vmem:[#allocation2] sm:$0xff]
      %v152 = vmul.f32 %v151, 0.125
      %v153 = vld [vmem:[#allocation5] sm:$0xff]
      %v154 = vld [vmem:[#allocation5 + $0x8] sm:$0xff]
      %v155 = vld [vmem:[#allocation5 + $0x10] sm:$0xff]
      %v156 = vld [vmem:[#allocation5 + $0x18] sm:$0xff]
      %v157 = vld [vmem:[%s2] sm:$0x1]
      %v159 = vperm.slane %v157, 0
      %v162 = vsel %vm66, %v152, 0
      %164 = vmatpush.msra.mxu0 0.0
      %165 = vmatpush.msra.mxu0 0.0
      %166 = vmatpush.msra.mxu0 0.0
      %167 = vmatpush.msra.mxu0 0.0
      %168 = vmatpush.msra.mxu0 0.0
      %169 = vmatpush.msra.mxu0 0.0
      %170 = vmatpush.msra.mxu0 0.0
      %171 = vmatpush.msra.mxu0 0.0
      %172 = vmatpush.msra.mxu0 0.0
      %173 = vmatpush.msra.mxu0 0.0
      %174 = vmatpush.msra.mxu0 0.0
      %175 = vmatpush.msra.mxu0 0.0
      %176 = vmatpush.msra.mxu0 %v156
      %177 = vmatpush.msra.mxu0 %v155
      %178 = vmatpush.msra.mxu0 %v154
      %179 = vmatpush.msra.mxu0 %v153
      %180 = vmatmul.f32.gmra.mxu0 %v162
      %v181 = vpop.f32.mrf.mxu0
      %v182 = vadd.f32 %v159, %v181
      %183 = vdwg.mxu0
      %v184 = vld [vmem:[%s3] sm:$0xff]
      %v185 = vlaneseq
      %v186 = vand.u32 %v185, 127
      %187 = vmax.xlane.f32.xlu0 %v182
      %v188 = vpop.xlane.xlu0 %187
      %v189 = vsub.f32 %v182, %v188
      %v190 = vmul.f32 %v189, 1.442695
      %v191 = vpow.pop %v190
      %192 = vadd.xlane.f32.xlu0 %v191
      %v193 = vpop.xlane.xlu0 %192
      %v194 = vlog2.pop %v193
      %v195 = vmul.f32 %v194, 0.6931472
      %v196 = vadd.f32 %v188, %v195
      %197 = vset.pattern.permute.xlu0 0
      %198 = vperm.xlu0 %197, %v184
      %v199 = vpop.permute.xlu0 %198
      %vm200 = vcmp.eq.s32.totalorder %v186, %v199
      %v201 = vsel %vm200, 1, 0
      %v202 = vcvt.s32.f32 %v201
      %v203 = vmul.f32 %v182, %v202
      %204 = vadd.xlane.f32.xlu0 %v203
      %v205 = vpop.xlane.xlu0 %204
      %v206 = vsub.f32 %v196, %v205
      %vm207 = vcmp.eq.f32.partialorder %v182, %v188
      %v208 = vsel %vm207, %v186, 128
      %v209 = vand.u32 %v208, 65535
      %v210 = vshra.s32 %v208, 16
      %v211 = vcvt.s32.f32 %v209
      %v212 = vcvt.s32.f32 %v210
      %213 = vmin.xlane.f32.xlu0 %v212
      %v214 = vpop.xlane.xlu0 %213
      %vm215 = vcmp.eq.f32.partialorder %v212, %v214
      %v216 = vsel %vm215, %v211, inf
      %217 = vmin.xlane.f32.xlu0 %v216
      %v218 = vpop.xlane.xlu0 %217
      %v219 = vcvt.f32.s32 %v218
      %v220 = vcvt.f32.s32 %v214
      %v221 = vshll.u32 %v220, 16
      %v222 = vadd.s32 %v221, %v219
      %vm223 = vcmp.eq.s32.totalorder %v222, %v184
      %v224 = vsel %vm223, 1, 0
      %v225 = vcvt.s32.f32 %v224
      %v226 = vlaneseq
      %v227 = vshrl.u32 %v226, 7
      %s228 = smul.u32 0, 8
      %v229 = vstv %s228
      %v230 = vadd.s32 %v227, %v229
      %vm231 = vcmp.lt.s32.totalorder %v230, 2
      %v232 = vsel %vm231, 1, 0
      %v233 = vcvt.s32.f32 %v232
      %v234 = vmul.f32 %v206, %v233
      %vm235 = vcmask 7168
      %236 = vst.msk [vmem:[%s4] sm:$0xff] %vm235, %v234
      %v237 = vmul.f32 %v225, %v233
      %238 = vst.msk [vmem:[%s5] sm:$0xff] %vm235, %v237
    $region33: #{tpu_custom_call.1} parent=1 // pred_fallthru
      _
    // Predicated region
    $region34: #{tpu_custom_call.1} parent=1 // pred_check
      _
    $region35: #{tpu_custom_call.1} parent=1 // pred_check_branch
      %240 = sbr.rel (0) target = $region37
    $region36: #{tpu_custom_call.1} parent=1 // pred_region
      _
    $region37: #{tpu_custom_call.1} parent=1 // pred_fallthru
      _
    // Predicated region
    $region38: #{tpu_custom_call.1} parent=1 // pred_check
      _
    $region39: #{tpu_custom_call.1} parent=1 // pred_check_branch
      %242 = sbr.rel (0) target = $region41
    $region40: #{tpu_custom_call.1} parent=1 // pred_region
      _
    $region41: #{tpu_custom_call.1} parent=1 // pred_fallthru
      _
    // Predicated region
    $region42: #{tpu_custom_call.1} parent=1 // pred_check
      _
    $region43: #{tpu_custom_call.1} parent=1 // pred_check_branch
      %244 = sbr.rel (0) target = $region45
    $region44: #{tpu_custom_call.1} parent=1 // pred_region
      _
    $region45: #{tpu_custom_call.1} parent=1 // pred_fallthru
      _
    // Predicated region
    $region46: #{tpu_custom_call.1} parent=1 // pred_check
      _
    $region47: #{tpu_custom_call.1} parent=1 // pred_check_branch
      %246 = sbr.rel (0) target = $region49
    $region48: #{tpu_custom_call.1} parent=1 // pred_region
      _
    $region49: #{tpu_custom_call.1} parent=1 // pred_fallthru
      _
    %247 = vsyncpa [#allocation4], 1
    %248 = vsyncpa [#allocation6], 1

</llo_original>
